<compile_context>
chip_gen: v5e
topology: v5e:2x2
jax: 0.10.0
libtpu: 0.0.40
codegen_flags: <defaults>
</compile_context>

<pallas_src>
from functools import partial

import jax
import jax.numpy as jnp
from jax.experimental import pallas as pl
from jax.experimental.pallas import tpu as pltpu

INPUT_SIZE = 5
HIDDEN = 8
NUM_CLASSES = 1
LANE = 128


def _mlp_kernel(x_ref, w1_ref, b1_ref, w2_ref, b2_ref, w3_ref, b3_ref,
                w4_ref, b4_ref, o_ref):
    # x_ref tile: (INPUT_SIZE, bt), possibly bf16 (HBM-traffic saving);
    # compute in f32 (the cast is a VPU op, fully hidden behind the DMA).
    x = x_ref[...].astype(jnp.float32)

    h = jnp.dot(w1_ref[...], x, preferred_element_type=jnp.float32) + b1_ref[...]
    h = jnp.maximum(h, 0.0)                                            # relu1

    h = jnp.dot(w2_ref[...], h, preferred_element_type=jnp.float32) + b2_ref[...]
    h = jnp.maximum(h, 0.0)                                            # relu2

    h = jnp.dot(w3_ref[...], h, preferred_element_type=jnp.float32) + b3_ref[...]
    h = jnp.maximum(h, 0.0)                                            # relu3

    # Last layer (8 -> 1): VPU multiply + sublane reduce (avoids an M=1 MXU
    # matmul; the kernel is memory/overhead bound, not MXU bound).
    out = jnp.sum(h * w4_ref[...], axis=0, keepdims=True) + b4_ref[...]
    o_ref[...] = jnp.minimum(out, 100.0).astype(o_ref.dtype)           # clamp(max=100)


def _cdiv(a, b):
    return -(-a // b)


def _round_up(n, m):
    return _cdiv(n, m) * m


def _plan_tiles(B, block_batch):
    """Pick (bt, n_tiles): bt multiple of 128, <=block_batch; n>=2 for large B."""
    B = max(int(B), 1)
    block_batch = _round_up(max(int(block_batch), LANE), LANE)   # enforce 128-multiple
    n = _cdiv(B, block_batch)
    if B > 2 * LANE:
        n = max(n, 2)          # >=2 grid steps so v7x can use both TensorCores
    bt = min(_round_up(_cdiv(B, n), LANE), block_batch)
    n = _cdiv(B, bt)
    if B > 2 * LANE:
        n = max(n, 2)
    return bt, n


@partial(jax.jit, static_argnames=("block_batch", "input_dtype", "x_feature_major"))
def _forward_impl(x, params, *, block_batch, input_dtype, x_feature_major):
    if x_feature_major:
        B = x.shape[1]
        xt = x                                       # already (INPUT_SIZE, B)
    else:
        B = x.shape[0]
        xt = x.T                                     # (INPUT_SIZE, B)

    bt, n = _plan_tiles(B, block_batch)
    bp = bt * n
    grid = (n,)

    # Cast + pad; fused with the transpose above into one XLA op under jit.
    xt = jnp.pad(xt.astype(input_dtype), ((0, 0), (0, bp - B)))        # (5, bp)

    # Weights kept in PyTorch (out, in) layout -> each layer is W @ h.
    w1 = params["w1"].astype(jnp.float32)                              # (8, 5)
    w2 = params["w2"].astype(jnp.float32)                              # (8, 8)
    w3 = params["w3"].astype(jnp.float32)                              # (8, 8)
    w4 = params["w4"].reshape(NUM_CLASSES, HIDDEN).T.astype(jnp.float32)  # (8, 1)
    b1 = params["b1"].reshape(HIDDEN, 1).astype(jnp.float32)
    b2 = params["b2"].reshape(HIDDEN, 1).astype(jnp.float32)
    b3 = params["b3"].reshape(HIDDEN, 1).astype(jnp.float32)
    b4 = params["b4"].reshape(NUM_CLASSES, 1).astype(jnp.float32)

    def full_block(arr):
        # Grid-resident parameter: constant block index -> fetched once, kept
        # in VMEM across all batch grid steps.
        return pl.BlockSpec(arr.shape, lambda i: (0, 0))

    x_spec = pl.BlockSpec((INPUT_SIZE, bt), lambda i: (0, i))
    o_spec = pl.BlockSpec((NUM_CLASSES, bt), lambda i: (0, i))

    flops = 2 * bp * (INPUT_SIZE * HIDDEN + 2 * HIDDEN * HIDDEN + HIDDEN)
    bytes_accessed = (bp * INPUT_SIZE * jnp.dtype(input_dtype).itemsize
                      + bp * NUM_CLASSES * 4
                      + sum(int(a.size) * 4 for a in (w1, w2, w3, w4, b1, b2, b3, b4)))
    cost = pl.CostEstimate(flops=flops, transcendentals=0,
                           bytes_accessed=bytes_accessed)

    out_t = pl.pallas_call(
        _mlp_kernel,
        out_shape=jax.ShapeDtypeStruct((NUM_CLASSES, bp), jnp.float32),
        grid=grid,
        in_specs=[x_spec,
                  full_block(w1), full_block(b1),
                  full_block(w2), full_block(b2),
                  full_block(w3), full_block(b3),
                  full_block(w4), full_block(b4)],
        out_specs=o_spec,
        compiler_params=pltpu.CompilerParams(
            dimension_semantics=("parallel",)),
        cost_estimate=cost,
    )(xt, w1, b1, w2, b2, w3, b3, w4, b4)

    # (1, bp) -> (B, 1): slice + reshape only (no extra HBM pass).
    return out_t[0, :B].reshape(B, NUM_CLASSES)


def discharge_neural_net(x, params, *, block_batch=64 * 1024,
                         input_dtype=jnp.bfloat16, x_feature_major=False):
    """Forward pass matching PyTorch DischargeNeuralNet.

    x: (B, INPUT_SIZE) float-like (or (INPUT_SIZE, B) if x_feature_major=True).
    params: PyTorch-convention (out_features, in_features) weights + biases.
    Returns (B, NUM_CLASSES) float32.
    """
    return _forward_impl(x, params, block_batch=int(block_batch),
                         input_dtype=input_dtype,
                         x_feature_major=bool(x_feature_major))


def init_params(key):
    """Deterministic synthetic init matching nn.Linear shapes (out_features, in_features)."""
    ks = jax.random.split(key, 8)

    def uniform(k, shape, fan_in):
        bound = 1.0 / jnp.sqrt(fan_in)
        return jax.random.uniform(k, shape, jnp.float32, -bound, bound)

    return {
        "w1": uniform(ks[0], (HIDDEN, INPUT_SIZE), INPUT_SIZE),
        "b1": uniform(ks[1], (HIDDEN,), INPUT_SIZE),
        "w2": uniform(ks[2], (HIDDEN, HIDDEN), HIDDEN),
        "b2": uniform(ks[3], (HIDDEN,), HIDDEN),
        "w3": uniform(ks[4], (HIDDEN, HIDDEN), HIDDEN),
        "b3": uniform(ks[5], (HIDDEN,), HIDDEN),
        "w4": uniform(ks[6], (NUM_CLASSES, HIDDEN), HIDDEN),
        "b4": uniform(ks[7], (NUM_CLASSES,), HIDDEN),
    }


def _reference(x, p):
    """Pure-JAX reference identical to the PyTorch forward."""
    h = jnp.maximum(x @ p["w1"].T + p["b1"], 0.0)
    h = jnp.maximum(h @ p["w2"].T + p["b2"], 0.0)
    h = jnp.maximum(h @ p["w3"].T + p["b3"], 0.0)
    out = h @ p["w4"].T + p["b4"]
    return jnp.minimum(out, 100.0)


if __name__ == "__main__":
    key = jax.random.PRNGKey(0)
    k_params, k_x = jax.random.split(key)
    params = init_params(k_params)

    # bf16 x stream => relax tolerance vs the f32 reference.
    ATOL = RTOL = 2e-2

    # Small batch (single grid step).
    x = jax.random.normal(k_x, (8, INPUT_SIZE), jnp.float32)
    out = jax.block_until_ready(discharge_neural_net(x, params))
    ref = _reference(x, params)
    assert out.shape == (8, NUM_CLASSES)
    assert jnp.allclose(out, ref, atol=ATOL, rtol=RTOL), "mismatch vs reference (B=8)"

    # Larger batch: exercises >=2 grid steps (megacore path) and tile padding.
    x2 = jax.random.normal(jax.random.PRNGKey(1), (300, INPUT_SIZE), jnp.float32)
    out2 = jax.block_until_ready(discharge_neural_net(x2, params))
    ref2 = _reference(x2, params)
    assert out2.shape == (300, NUM_CLASSES)
    assert jnp.allclose(out2, ref2, atol=ATOL, rtol=RTOL), "mismatch vs reference (B=300)"

    print("KERNEL_OK")
</pallas_src>

<mosaic_0001>
module attributes {stable_mosaic.version = 11 : i64} {
  func.func @_mlp_kernel(%arg0: i32, %arg1: memref<5x128xbf16, #tpu.memory_space<vmem>>, %arg2: memref<8x5xf32, #tpu.memory_space<vmem>>, %arg3: memref<8x1xf32, #tpu.memory_space<vmem>>, %arg4: memref<8x8xf32, #tpu.memory_space<vmem>>, %arg5: memref<8x1xf32, #tpu.memory_space<vmem>>, %arg6: memref<8x8xf32, #tpu.memory_space<vmem>>, %arg7: memref<8x1xf32, #tpu.memory_space<vmem>>, %arg8: memref<8x1xf32, #tpu.memory_space<vmem>>, %arg9: memref<1x1xf32, #tpu.memory_space<vmem>>, %arg10: memref<1x128xf32, #tpu.memory_space<vmem>>) attributes {dimension_semantics = [#tpu.dimension_semantics<parallel>], iteration_bounds = array<i64: 1>, scalar_prefetch = 0 : i64, scratch_operands = 0 : i64, tpu.core_type = #tpu.core_type<tc>, window_params = [{transform_indices = @transform_0, window_bounds = array<i64: 5, 128>}, {pipeline_mode = #tpu.pipeline_mode<synchronous>, transform_indices = @transform_1, window_bounds = array<i64: 8, 5>}, {pipeline_mode = #tpu.pipeline_mode<synchronous>, transform_indices = @transform_2, window_bounds = array<i64: 8, 1>}, {pipeline_mode = #tpu.pipeline_mode<synchronous>, transform_indices = @transform_3, window_bounds = array<i64: 8, 8>}, {pipeline_mode = #tpu.pipeline_mode<synchronous>, transform_indices = @transform_4, window_bounds = array<i64: 8, 1>}, {pipeline_mode = #tpu.pipeline_mode<synchronous>, transform_indices = @transform_5, window_bounds = array<i64: 8, 8>}, {pipeline_mode = #tpu.pipeline_mode<synchronous>, transform_indices = @transform_6, window_bounds = array<i64: 8, 1>}, {pipeline_mode = #tpu.pipeline_mode<synchronous>, transform_indices = @transform_7, window_bounds = array<i64: 8, 1>}, {pipeline_mode = #tpu.pipeline_mode<synchronous>, transform_indices = @transform_8, window_bounds = array<i64: 1, 1>}, {transform_indices = @transform_9, window_bounds = array<i64: 1, 128>}]} {
    %c0 = arith.constant 0 : index
    %c0_0 = arith.constant 0 : index
    %0 = vector.load %arg1[%c0, %c0_0] : memref<5x128xbf16, #tpu.memory_space<vmem>>, vector<5x128xbf16>
    %1 = arith.extf %0 : vector<5x128xbf16> to vector<5x128xf32>
    %c0_1 = arith.constant 0 : index
    %c0_2 = arith.constant 0 : index
    %2 = vector.load %arg2[%c0_1, %c0_2] : memref<8x5xf32, #tpu.memory_space<vmem>>, vector<8x5xf32>
    %cst = arith.constant dense<0.000000e+00> : vector<8x128xf32>
    %3 = tpu.matmul %2, %1, %cst {dimension_numbers = #tpu.dot_dimension_numbers<[1], [0], [0], [1], [0, 0, 1, 1], [], []>} : vector<8x5xf32>, vector<5x128xf32>, vector<8x128xf32> -> vector<8x128xf32>
    %c0_3 = arith.constant 0 : index
    %c0_4 = arith.constant 0 : index
    %4 = vector.load %arg3[%c0_3, %c0_4] : memref<8x1xf32, #tpu.memory_space<vmem>>, vector<8x1xf32>
    %5 = vector.broadcast %4 : vector<8x1xf32> to vector<8x128xf32>
    %6 = arith.addf %3, %5 : vector<8x128xf32>
    %cst_5 = arith.constant 0.000000e+00 : f32
    %7 = vector.broadcast %cst_5 : f32 to vector<8x128xf32>
    %8 = arith.maximumf %6, %7 : vector<8x128xf32>
    %c0_6 = arith.constant 0 : index
    %c0_7 = arith.constant 0 : index
    %9 = vector.load %arg4[%c0_6, %c0_7] : memref<8x8xf32, #tpu.memory_space<vmem>>, vector<8x8xf32>
    %cst_8 = arith.constant dense<0.000000e+00> : vector<8x128xf32>
    %10 = tpu.matmul %9, %8, %cst_8 {dimension_numbers = #tpu.dot_dimension_numbers<[1], [0], [0], [1], [0, 0, 1, 1], [], []>} : vector<8x8xf32>, vector<8x128xf32>, vector<8x128xf32> -> vector<8x128xf32>
    %c0_9 = arith.constant 0 : index
    %c0_10 = arith.constant 0 : index
    %11 = vector.load %arg5[%c0_9, %c0_10] : memref<8x1xf32, #tpu.memory_space<vmem>>, vector<8x1xf32>
    %12 = vector.broadcast %11 : vector<8x1xf32> to vector<8x128xf32>
    %13 = arith.addf %10, %12 : vector<8x128xf32>
    %cst_11 = arith.constant 0.000000e+00 : f32
    %14 = vector.broadcast %cst_11 : f32 to vector<8x128xf32>
    %15 = arith.maximumf %13, %14 : vector<8x128xf32>
    %c0_12 = arith.constant 0 : index
    %c0_13 = arith.constant 0 : index
    %16 = vector.load %arg6[%c0_12, %c0_13] : memref<8x8xf32, #tpu.memory_space<vmem>>, vector<8x8xf32>
    %cst_14 = arith.constant dense<0.000000e+00> : vector<8x128xf32>
    %17 = tpu.matmul %16, %15, %cst_14 {dimension_numbers = #tpu.dot_dimension_numbers<[1], [0], [0], [1], [0, 0, 1, 1], [], []>} : vector<8x8xf32>, vector<8x128xf32>, vector<8x128xf32> -> vector<8x128xf32>
    %c0_15 = arith.constant 0 : index
    %c0_16 = arith.constant 0 : index
    %18 = vector.load %arg7[%c0_15, %c0_16] : memref<8x1xf32, #tpu.memory_space<vmem>>, vector<8x1xf32>
    %19 = vector.broadcast %18 : vector<8x1xf32> to vector<8x128xf32>
    %20 = arith.addf %17, %19 : vector<8x128xf32>
    %cst_17 = arith.constant 0.000000e+00 : f32
    %21 = vector.broadcast %cst_17 : f32 to vector<8x128xf32>
    %22 = arith.maximumf %20, %21 : vector<8x128xf32>
    %c0_18 = arith.constant 0 : index
    %c0_19 = arith.constant 0 : index
    %23 = vector.load %arg8[%c0_18, %c0_19] : memref<8x1xf32, #tpu.memory_space<vmem>>, vector<8x1xf32>
    %24 = vector.broadcast %23 : vector<8x1xf32> to vector<8x128xf32>
    %25 = arith.mulf %22, %24 : vector<8x128xf32>
    %cst_20 = arith.constant dense<0.000000e+00> : vector<128xf32>
    %26 = vector.multi_reduction <add>, %25, %cst_20 [0] : vector<8x128xf32> to vector<128xf32>
    %27 = vector.shape_cast %26 : vector<128xf32> to vector<1x128xf32>
    %c0_21 = arith.constant 0 : index
    %c0_22 = arith.constant 0 : index
    %28 = vector.load %arg9[%c0_21, %c0_22] : memref<1x1xf32, #tpu.memory_space<vmem>>, vector<1x1xf32>
    %29 = vector.broadcast %28 : vector<1x1xf32> to vector<1x128xf32>
    %30 = arith.addf %27, %29 : vector<1x128xf32>
    %cst_23 = arith.constant 1.000000e+02 : f32
    %31 = vector.broadcast %cst_23 : f32 to vector<1x128xf32>
    %32 = arith.minimumf %30, %31 : vector<1x128xf32>
    %c0_24 = arith.constant 0 : index
    %c0_25 = arith.constant 0 : index
    %33 = vector.load %arg10[%c0_24, %c0_25] : memref<1x128xf32, #tpu.memory_space<vmem>>, vector<1x128xf32>
    tpu.vector_store %arg10[%c0_24, %c0_25], %32 {strides = array<i32>} : memref<1x128xf32, #tpu.memory_space<vmem>>, vector<1x128xf32>,
    return
  }
  func.func @transform_0(%arg0: i32) -> (i32, i32) {
    %c0_i32 = arith.constant 0 : i32
    %c0_i32_0 = arith.constant 0 : i32
    return %c0_i32, %arg0 : i32, i32
  }
  func.func @transform_1(%arg0: i32) -> (i32, i32) {
    %c0_i32 = arith.constant 0 : i32
    %c0_i32_0 = arith.constant 0 : i32
    %c0_i32_1 = arith.constant 0 : i32
    return %c0_i32, %c0_i32_0 : i32, i32
  }
  func.func @transform_2(%arg0: i32) -> (i32, i32) {
    %c0_i32 = arith.constant 0 : i32
    %c0_i32_0 = arith.constant 0 : i32
    %c0_i32_1 = arith.constant 0 : i32
    return %c0_i32, %c0_i32_0 : i32, i32
  }
  func.func @transform_3(%arg0: i32) -> (i32, i32) {
    %c0_i32 = arith.constant 0 : i32
    %c0_i32_0 = arith.constant 0 : i32
    %c0_i32_1 = arith.constant 0 : i32
    return %c0_i32, %c0_i32_0 : i32, i32
  }
  func.func @transform_4(%arg0: i32) -> (i32, i32) {
    %c0_i32 = arith.constant 0 : i32
    %c0_i32_0 = arith.constant 0 : i32
    %c0_i32_1 = arith.constant 0 : i32
    return %c0_i32, %c0_i32_0 : i32, i32
  }
  func.func @transform_5(%arg0: i32) -> (i32, i32) {
    %c0_i32 = arith.constant 0 : i32
    %c0_i32_0 = arith.constant 0 : i32
    %c0_i32_1 = arith.constant 0 : i32
    return %c0_i32, %c0_i32_0 : i32, i32
  }
  func.func @transform_6(%arg0: i32) -> (i32, i32) {
    %c0_i32 = arith.constant 0 : i32
    %c0_i32_0 = arith.constant 0 : i32
    %c0_i32_1 = arith.constant 0 : i32
    return %c0_i32, %c0_i32_0 : i32, i32
  }
  func.func @transform_7(%arg0: i32) -> (i32, i32) {
    %c0_i32 = arith.constant 0 : i32
    %c0_i32_0 = arith.constant 0 : i32
    %c0_i32_1 = arith.constant 0 : i32
    return %c0_i32, %c0_i32_0 : i32, i32
  }
  func.func @transform_8(%arg0: i32) -> (i32, i32) {
    %c0_i32 = arith.constant 0 : i32
    %c0_i32_0 = arith.constant 0 : i32
    %c0_i32_1 = arith.constant 0 : i32
    return %c0_i32, %c0_i32_0 : i32, i32
  }
  func.func @transform_9(%arg0: i32) -> (i32, i32) {
    %c0_i32 = arith.constant 0 : i32
    %c0_i32_0 = arith.constant 0 : i32
    return %c0_i32, %arg0 : i32, i32
  }
}

</mosaic_0001>

<llo_original>
// kernel: _forward_impl.1
$region0: #{_forward_impl.1}
  #allocation0 [shape = 'u32[]', space=smem, size = 0x4, offset = 0x4, fixed_abs, tag = 'smem constant byte address 0x4 - core index']
  #allocation1 [shape = 'u32[72,128]{1,0:T(1,128)}', space=vmem, size = 0x9000, scoped, tag = 'internal scratch']
  #allocation2 [shape = 'f32[1,1]{1,0:T(1,128)S(1)}', space=vmem, size = 0x200, scoped, tag = 'scoped memory for _forward_impl.1']
  %s0 = inlined_call_operand.vmem [shape: bf16[5,128], index: 0, kind: input, shape index: {}]
  %s1 = inlined_call_operand.vmem [shape: f32[8,5], index: 1, kind: input, shape index: {}]
  %s2 = inlined_call_operand.vmem [shape: f32[8,1], index: 2, kind: input, shape index: {}]
  %s3 = inlined_call_operand.vmem [shape: f32[8,8], index: 3, kind: input, shape index: {}]
  %s4 = inlined_call_operand.vmem [shape: f32[8,1], index: 4, kind: input, shape index: {}]
  %s5 = inlined_call_operand.vmem [shape: f32[8,8], index: 5, kind: input, shape index: {}]
  %s6 = inlined_call_operand.vmem [shape: f32[8,1], index: 6, kind: input, shape index: {}]
  %s7 = inlined_call_operand.vmem [shape: f32[8,1], index: 7, kind: input, shape index: {}]
  %s8 = inlined_call_operand.<no memory space> [shape: f32[1,1], index: 8, kind: input, shape index: {}]
  %s9 = inlined_call_operand.vmem [shape: f32[1,128], index: 9, kind: output, shape index: {}]
  %s10 = sld [smem:[#allocation0]]
  $region46: #{_forward_impl.1} parent=0
    _
  %s12 = ssub.s32 1, %s10
  %s13 = scalar_select 0, %s12, %s10
  %v14 = vstv %s8
  %15 = vst [vmem:[#allocation2] sm:$0x1] %v14
  // Predicated region
  $region2: #{_forward_impl.1} parent=0 // pred_check
    _
  $region3: #{_forward_impl.1} parent=0 // pred_check_branch
    %17 = sbr.rel (0) target = $region5
  $region4: #{_forward_impl.1} parent=0 // pred_region
    _
  $region5: #{_forward_impl.1} parent=0 // pred_fallthru
    _
  // Predicated region
  $region6: #{_forward_impl.1} parent=0 // pred_check
    _
  $region7: #{_forward_impl.1} parent=0 // pred_check_branch
    %19 = sbr.rel (0) target = $region9
  $region8: #{_forward_impl.1} parent=0 // pred_region
    _
  $region9: #{_forward_impl.1} parent=0 // pred_fallthru
    _
  // Predicated region
  $region10: #{_forward_impl.1} parent=0 // pred_check
    _
  $region11: #{_forward_impl.1} parent=0 // pred_check_branch
    %21 = sbr.rel (0) target = $region13
  $region12: #{_forward_impl.1} parent=0 // pred_region
    _
  $region13: #{_forward_impl.1} parent=0 // pred_fallthru
    _
  // Predicated region
  $region14: #{_forward_impl.1} parent=0 // pred_check
    _
  $region15: #{_forward_impl.1} parent=0 // pred_check_branch
    %23 = sbr.rel (0) target = $region17
  $region16: #{_forward_impl.1} parent=0 // pred_region
    _
  $region17: #{_forward_impl.1} parent=0 // pred_fallthru
    _
  // Predicated region
  $region18: #{_forward_impl.1} parent=0 // pred_check
    _
  $region19: #{_forward_impl.1} parent=0 // pred_check_branch
    %25 = sbr.rel (0) target = $region21
  $region20: #{_forward_impl.1} parent=0 // pred_region
    _
  $region21: #{_forward_impl.1} parent=0 // pred_fallthru
    _
  // Predicated region
  $region22: #{_forward_impl.1} parent=0 // pred_check
    _
  $region23: #{_forward_impl.1} parent=0 // pred_check_branch
    %27 = sbr.rel (0) target = $region25
  $region24: #{_forward_impl.1} parent=0 // pred_region
    _
  $region25: #{_forward_impl.1} parent=0 // pred_fallthru
    _
  // Predicated region
  $region26: #{_forward_impl.1} parent=0 // pred_check
    _
  $region27: #{_forward_impl.1} parent=0 // pred_check_branch
    %29 = sbr.rel (0) target = $region29
  $region28: #{_forward_impl.1} parent=0 // pred_region
    _
  $region29: #{_forward_impl.1} parent=0 // pred_fallthru
    _
  // Predicated region
  $region30: #{_forward_impl.1} parent=0 // pred_check
    _
  $region31: #{_forward_impl.1} parent=0 // pred_check_branch
    %31 = sbr.rel (0) target = $region33
  $region32: #{_forward_impl.1} parent=0 // pred_region
    _
  $region33: #{_forward_impl.1} parent=0 // pred_fallthru
    _
  // Predicated region
  $region34: #{_forward_impl.1} parent=0 // pred_check
    _
  $region35: #{_forward_impl.1} parent=0 // pred_check_branch
    %33 = sbr.rel (0) target = $region37
  $region36: #{_forward_impl.1} parent=0 // pred_region
    _
  $region37: #{_forward_impl.1} parent=0 // pred_fallthru
    _
  %v34 = vld [vmem:[%s0] sm:$0x7]
  %v35 = vunpack.c.l.bf16 %v34
  %v36 = vld [vmem:[%s1] sm:$0xff]
  %v37 = vld [vmem:[%s2] sm:$0xff]
  %39 = vset.pattern.permute.xlu0 0
  %40 = vperm.xlu0 %39, %v37
  %v41 = vpop.permute.xlu0 %40
  %vm43 = vcmask 39936
  %v45 = vsel %vm43, %v36, 0
  %vm47 = vcmask 1044480
  %v49 = vsel %vm47, %v35, 0
  %51 = vmatpush.msra.mxu0 0.0
  %52 = vmatpush.msra.mxu0 0.0
  %53 = vmatpush.msra.mxu0 0.0
  %54 = vmatpush.msra.mxu0 0.0
  %55 = vmatpush.msra.mxu0 0.0
  %56 = vmatpush.msra.mxu0 0.0
  %57 = vmatpush.msra.mxu0 0.0
  %58 = vmatpush.msra.mxu0 0.0
  %59 = vmatpush.msra.mxu0 0.0
  %60 = vmatpush.msra.mxu0 0.0
  %61 = vmatpush.msra.mxu0 0.0
  %62 = vmatpush.msra.mxu0 0.0
  %63 = vmatpush.msra.mxu0 0.0
  %64 = vmatpush.msra.mxu0 0.0
  %65 = vmatpush.msra.mxu0 0.0
  %66 = vmatpush.msra.mxu0 %v49
  %67 = vmatmul.f32.gmra.mxu0 %v45
  %v68 = vpop.f32.mrf.mxu0
  %v69 = vadd.f32 %v41, %v68
  %70 = vdwg.mxu0
  %v71 = vmax.f32 %v69, 0.0
  %v72 = vld [vmem:[%s3] sm:$0xff]
  %v73 = vld [vmem:[%s4] sm:$0xff]
  %75 = vset.pattern.permute.xlu0 0
  %76 = vperm.xlu0 %75, %v73
  %v77 = vpop.permute.xlu0 %76
  %vm79 = vcmask 64512
  %v81 = vsel %vm79, %v72, 0
  %83 = vmatpush.msra.mxu0 0.0
  %84 = vmatpush.msra.mxu0 0.0
  %85 = vmatpush.msra.mxu0 0.0
  %86 = vmatpush.msra.mxu0 0.0
  %87 = vmatpush.msra.mxu0 0.0
  %88 = vmatpush.msra.mxu0 0.0
  %89 = vmatpush.msra.mxu0 0.0
  %90 = vmatpush.msra.mxu0 0.0
  %91 = vmatpush.msra.mxu0 0.0
  %92 = vmatpush.msra.mxu0 0.0
  %93 = vmatpush.msra.mxu0 0.0
  %94 = vmatpush.msra.mxu0 0.0
  %95 = vmatpush.msra.mxu0 0.0
  %96 = vmatpush.msra.mxu0 0.0
  %97 = vmatpush.msra.mxu0 0.0
  %98 = vmatpush.msra.mxu0 %v71
  %99 = vmatmul.f32.gmra.mxu0 %v81
  %v100 = vpop.f32.mrf.mxu0
  %v101 = vadd.f32 %v77, %v100
  %102 = vdwg.mxu0
  %v103 = vmax.f32 %v101, 0.0
  %v104 = vld [vmem:[%s5] sm:$0xff]
  %v105 = vld [vmem:[%s6] sm:$0xff]
  %107 = vset.pattern.permute.xlu0 0
  %108 = vperm.xlu0 %107, %v105
  %v109 = vpop.permute.xlu0 %108
  %v112 = vsel %vm79, %v104, 0
  %114 = vmatpush.msra.mxu0 0.0
  %115 = vmatpush.msra.mxu0 0.0
  %116 = vmatpush.msra.mxu0 0.0
  %117 = vmatpush.msra.mxu0 0.0
  %118 = vmatpush.msra.mxu0 0.0
  %119 = vmatpush.msra.mxu0 0.0
  %120 = vmatpush.msra.mxu0 0.0
  %121 = vmatpush.msra.mxu0 0.0
  %122 = vmatpush.msra.mxu0 0.0
  %123 = vmatpush.msra.mxu0 0.0
  %124 = vmatpush.msra.mxu0 0.0
  %125 = vmatpush.msra.mxu0 0.0
  %126 = vmatpush.msra.mxu0 0.0
  %127 = vmatpush.msra.mxu0 0.0
  %128 = vmatpush.msra.mxu0 0.0
  %129 = vmatpush.msra.mxu0 %v103
  %130 = vmatmul.f32.gmra.mxu0 %v112
  %v131 = vpop.f32.mrf.mxu0
  %v132 = vadd.f32 %v109, %v131
  %133 = vdwg.mxu0
  %v134 = vmax.f32 %v132, 0.0
  %v135 = vld [vmem:[%s7] sm:$0xff]
  %137 = vset.pattern.permute.xlu0 0
  %138 = vperm.xlu0 %137, %v135
  %v139 = vpop.permute.xlu0 %138
  %v141 = vmul.f32 %v134, %v139
  %v142 = vrot.slane %v141, 4
  %v143 = vadd.f32 %v141, %v142
  %v144 = vrot.slane %v143, 2
  %v145 = vadd.f32 %v143, %v144
  %v146 = vrot.slane %v145, 1
  %v147 = vadd.f32 %v145, %v146
  %v148 = vld [vmem:[#allocation2] sm:$0x1]
  %150 = vset.pattern.permute.xlu0 0
  %151 = vperm.xlu0 %150, %v148
  %v152 = vpop.permute.xlu0 %151
  %v154 = vperm.slane %v152, 0
  %v155 = vadd.f32 %v147, %v154
  %v156 = vmin.f32 %v155, 100.0
  %157 = vst [vmem:[%s9] sm:$0x1] %v156
  // Predicated region
  $region38: #{_forward_impl.1} parent=0 // pred_check
    _
  $region39: #{_forward_impl.1} parent=0 // pred_check_branch
    %159 = sbr.rel (0) target = $region41
  $region40: #{_forward_impl.1} parent=0 // pred_region
    _
  $region41: #{_forward_impl.1} parent=0 // pred_fallthru
    _
  // Predicated region
  $region42: #{_forward_impl.1} parent=0 // pred_check
    _
  $region43: #{_forward_impl.1} parent=0 // pred_check_branch
    %161 = sbr.rel (0) target = $region45
  $region44: #{_forward_impl.1} parent=0 // pred_region
    _
  $region45: #{_forward_impl.1} parent=0 // pred_fallthru
    _

</llo_original>
